<compile_context>
chip_gen: v5e
topology: v5e:2x2
jax: 0.10.0
libtpu: 0.0.40
codegen_flags: <defaults>
</compile_context>

<pallas_src>
import functools

import jax
import jax.numpy as jnp
from jax.experimental import pallas as pl
from jax.experimental.pallas import tpu as pltpu


def _round_up(v, m):
    return ((v + m - 1) // m) * m


def _sublane_multiple(dtype):
    # Min second-to-last-dim multiple per packed dtype: f32->8, bf16->16, int8->32.
    return {4: 8, 2: 16, 1: 32}[jnp.dtype(dtype).itemsize]


def _pick_tile(dim, cap, multiple):
    """Pick tile <= cap (a multiple of `multiple`) so padded_dim = tile * nblocks
    with minimal padding.  Never rounds the problem up to the cap."""
    d = _round_up(max(dim, 1), multiple)
    nblocks = -(-d // cap)
    tile = _round_up(-(-d // nblocks), multiple)
    return tile, tile * nblocks


def _linear_kernel(x_ref, w_ref, b_ref, o_ref):
    # x_ref: (tm, tk) operand dtype, w_ref: (tk, tn) operand dtype,
    # b_ref: (1, tn) f32, o_ref: (tm, tn) f32.
    # o_ref is resident across the K grid axis (index_map ignores k), so it
    # doubles as the f32 accumulator — no separate scratch needed.
    k = pl.program_id(2)

    @pl.when(k == 0)
    def _():
        o_ref[...] = jnp.zeros_like(o_ref)

    o_ref[...] += jnp.dot(x_ref[...], w_ref[...],
                          preferred_element_type=jnp.float32)

    @pl.when(k == pl.num_programs(2) - 1)
    def _():
        # Bias add only in the epilogue (VPU slack), not in the hot loop.
        o_ref[...] += b_ref[...]


@functools.partial(jax.jit, static_argnames=("tm", "tn", "tk"))
def _linear_pallas(x_p, w_p, b_p, tm, tn, tk):
    """Tiled y_p = x_p @ w_p + b_p on padded operands (f32 output).

    x_p: (Np, Kp), w_p: (Kp, Mp), b_p: (1, Mp) — Np/Kp/Mp multiples of tm/tk/tn.
    """
    np_, kp = x_p.shape
    mp = w_p.shape[1]
    grid = (np_ // tm, mp // tn, kp // tk)

    itemsize = jnp.dtype(x_p.dtype).itemsize
    # Actual HBM traffic: x is re-read once per output-column block, W once per
    # row block, the f32 output is written once, bias read per column block.
    cost = pl.CostEstimate(
        flops=2 * np_ * kp * mp,
        transcendentals=0,
        bytes_accessed=(np_ * kp * itemsize * grid[1]
                        + kp * mp * itemsize * grid[0]
                        + np_ * mp * 4
                        + mp * 4 * grid[0]),
    )

    return pl.pallas_call(
        _linear_kernel,
        out_shape=jax.ShapeDtypeStruct((np_, mp), jnp.float32),
        grid_spec=pltpu.PrefetchScalarGridSpec(
            num_scalar_prefetch=0,
            grid=grid,
            in_specs=[
                pl.BlockSpec((tm, tk), lambda i, j, k: (i, k)),
                pl.BlockSpec((tk, tn), lambda i, j, k: (k, j)),
                pl.BlockSpec((1, tn), lambda i, j, k: (0, j)),
            ],
            out_specs=pl.BlockSpec((tm, tn), lambda i, j, k: (i, j)),
        ),
        compiler_params=pltpu.CompilerParams(
            dimension_semantics=("parallel", "parallel", "arbitrary"),
            # Worst-case double-buffered footprint at the caps is ~10-12 MiB;
            # 32 MiB is safe on v5e (128 MiB phys), v6e (128 MiB) and v7x (64 MiB).
            vmem_limit_bytes=32 << 20,
        ),
        cost_estimate=cost,
    )(x_p, w_p, b_p)


class LinearRegression:
    """JAX/Pallas port of the PyTorch LinearRegression module."""

    def __init__(self, input_dim, output_dim, key, param_dtype=jnp.bfloat16):
        kw, kb = jax.random.split(key)
        bound = 1.0 / (input_dim ** 0.5)
        # Mimic nn.Linear default init U(-1/sqrt(in), 1/sqrt(in)).  Params kept
        # in f32; the MXU operands are cast to param_dtype (bf16 fast path).
        self.weight = jax.random.uniform(
            kw, (output_dim, input_dim), jnp.float32, minval=-bound, maxval=bound)
        self.bias = jax.random.uniform(
            kb, (output_dim,), jnp.float32, minval=-bound, maxval=bound)

        self.input_dim = input_dim
        self.output_dim = output_dim
        self._param_dtype = param_dtype
        self._sub = _sublane_multiple(param_dtype)

        # Tile caps sized per operand width so the double-buffered footprint
        # stays well inside every generation's scoped VMEM budget.
        if jnp.dtype(param_dtype).itemsize <= 2:
            self._tm_cap, self._tk_cap, self._tn_cap = 512, 1024, 1024
        else:
            self._tm_cap, self._tk_cap, self._tn_cap = 512, 512, 512

        # Divisor-based K/M tiles picked once; W/b pre-transposed + pre-padded
        # once (steady-state forward only pads x, and only when necessary).
        self._tk, self._kp = _pick_tile(input_dim, self._tk_cap, 128)
        self._tn, self._mp = _pick_tile(output_dim, self._tn_cap, 128)

        # v7x has 2 TensorCores sharing the "parallel" grid axes: if M fits in
        # one block, split the output columns so at least one parallel axis has
        # >= 2 blocks (x re-read cost is negligible for M <= tn_cap).
        if self._mp // self._tn == 1 and self._mp >= 256:
            tn = 128 * max(1, (self._mp // 128) // 2)
            while self._mp % tn:
                tn -= 128
            self._tn = tn

        w_t = self.weight.T.astype(param_dtype)                      # (K, M)
        self._w_padded = jnp.pad(
            w_t, ((0, self._kp - input_dim), (0, self._mp - output_dim)))
        self._b_padded = jnp.pad(
            self.bias.astype(jnp.float32),
            (0, self._mp - output_dim)).reshape(1, self._mp)

    def __call__(self, x):
        n, k = x.shape
        assert k == self.input_dim, (k, self.input_dim)

        # Single row block for small batches (W streams from HBM exactly once);
        # divisor-style tm for larger batches, rounded to the dtype's sublane
        # multiple (16 for bf16).
        n_sub = _round_up(n, self._sub)
        tm, np_ = _pick_tile(n_sub, self._tm_cap, self._sub)

        x_c = x if x.dtype == self._param_dtype else x.astype(self._param_dtype)
        if (np_, self._kp) != (n, k):
            x_c = jnp.pad(x_c, ((0, np_ - n), (0, self._kp - k)))

        out_p = _linear_pallas(x_c, self._w_padded, self._b_padded,
                               tm, self._tn, self._tk)
        out = out_p[:n, :self.output_dim]
        return out if out.dtype == x.dtype else out.astype(x.dtype)


if __name__ == "__main__":
    key = jax.random.PRNGKey(0)

    # --- Case 1: matches the PyTorch script: x = [[1],[2],[3],[4]], in=1, out=1 ---
    x = jnp.array([[1.0], [2.0], [3.0], [4.0]], dtype=jnp.float32)
    model = LinearRegression(input_dim=1, output_dim=1, key=key)
    y = jax.block_until_ready(model(x))

    # Reference using the same math as the kernel (bf16 operands, f32 accumulate).
    w_bf = model.weight.astype(jnp.bfloat16)
    y_ref = jnp.dot(x.astype(jnp.bfloat16), w_bf.T,
                    preferred_element_type=jnp.float32) + model.bias
    assert y.shape == (4, 1)
    assert jnp.allclose(y, y_ref, atol=1e-5), (y, y_ref)

    # --- Case 2: larger shapes to exercise the tiled grid (N=264 -> tm=272,
    #     K=640 -> tk=640 (no padding!), M=130 -> mp=256 split into two
    #     tn=128 column blocks for the parallel axis). ---
    k2, kx = jax.random.split(jax.random.PRNGKey(1))
    model2 = LinearRegression(input_dim=640, output_dim=130, key=k2)
    x2 = jax.random.normal(kx, (264, 640), jnp.float32)
    y2 = jax.block_until_ready(model2(x2))

    # bf16-operand / f32-accumulate reference (same math as the kernel).
    w2_bf = model2.weight.astype(jnp.bfloat16)
    y2_ref_bf = jnp.dot(x2.astype(jnp.bfloat16), w2_bf.T,
                        preferred_element_type=jnp.float32) + model2.bias
    # Full-precision reference as an overall-accuracy sanity check.
    y2_ref_f32 = jnp.dot(x2, model2.weight.T,
                         precision=jax.lax.Precision.HIGHEST) + model2.bias

    assert y2.shape == (264, 130)
    assert jnp.allclose(y2, y2_ref_bf, atol=1e-3, rtol=1e-3), (
        float(jnp.max(jnp.abs(y2 - y2_ref_bf))))
    assert jnp.allclose(y2, y2_ref_f32, atol=2e-2, rtol=2e-2), (
        float(jnp.max(jnp.abs(y2 - y2_ref_f32))))

    print("KERNEL_OK")
</pallas_src>

<mosaic_0001>
module attributes {stable_mosaic.version = 11 : i64} {
  func.func @_linear_kernel(%arg0: i32, %arg1: i32, %arg2: i32, %arg3: memref<16x128xbf16, #tpu.memory_space<vmem>>, %arg4: memref<128x128xbf16, #tpu.memory_space<vmem>>, %arg5: memref<1x128xf32, #tpu.memory_space<vmem>>, %arg6: memref<16x128xf32, #tpu.memory_space<vmem>>) attributes {dimension_semantics = [#tpu.dimension_semantics<parallel>, #tpu.dimension_semantics<parallel>, #tpu.dimension_semantics<arbitrary>], iteration_bounds = array<i64: 1, 1, 1>, scalar_prefetch = 0 : i64, scratch_operands = 0 : i64, tpu.core_type = #tpu.core_type<tc>, window_params = [{transform_indices = @transform_0, window_bounds = array<i64: 16, 128>}, {transform_indices = @transform_1, window_bounds = array<i64: 128, 128>}, {transform_indices = @transform_2, window_bounds = array<i64: 1, 128>}, {transform_indices = @transform_3, window_bounds = array<i64: 16, 128>}]} {
    %c0_i32 = arith.constant 0 : i32
    %0 = arith.cmpi eq, %arg2, %c0_i32 : i32
    %1 = arith.extui %0 : i1 to i32
    %c0_i32_0 = arith.constant 0 : i32
    %2 = arith.cmpi ne, %1, %c0_i32_0 : i32
    scf.if %2 {
      %cst_10 = arith.constant 0.000000e+00 : f32
      %12 = vector.broadcast %cst_10 : f32 to vector<16x128xf32>
      %c0_11 = arith.constant 0 : index
      %c0_12 = arith.constant 0 : index
      %13 = vector.load %arg6[%c0_11, %c0_12] : memref<16x128xf32, #tpu.memory_space<vmem>>, vector<16x128xf32>
      tpu.vector_store %arg6[%c0_11, %c0_12], %12 {strides = array<i32>} : memref<16x128xf32, #tpu.memory_space<vmem>>, vector<16x128xf32>,
    } else {
    }
    %c0 = arith.constant 0 : index
    %c0_1 = arith.constant 0 : index
    %3 = vector.load %arg6[%c0, %c0_1] : memref<16x128xf32, #tpu.memory_space<vmem>>, vector<16x128xf32>
    %c0_2 = arith.constant 0 : index
    %c0_3 = arith.constant 0 : index
    %4 = vector.load %arg3[%c0_2, %c0_3] : memref<16x128xbf16, #tpu.memory_space<vmem>>, vector<16x128xbf16>
    %c0_4 = arith.constant 0 : index
    %c0_5 = arith.constant 0 : index
    %5 = vector.load %arg4[%c0_4, %c0_5] : memref<128x128xbf16, #tpu.memory_space<vmem>>, vector<128x128xbf16>
    %cst = arith.constant dense<0.000000e+00> : vector<16x128xf32>
    %6 = tpu.matmul %4, %5, %cst {dimension_numbers = #tpu.dot_dimension_numbers<[1], [0], [0], [1], [0, 0, 1, 1], [], []>} : vector<16x128xbf16>, vector<128x128xbf16>, vector<16x128xf32> -> vector<16x128xf32>
    %7 = arith.addf %3, %6 : vector<16x128xf32>
    %c0_6 = arith.constant 0 : index
    %c0_7 = arith.constant 0 : index
    %8 = vector.load %arg6[%c0_6, %c0_7] : memref<16x128xf32, #tpu.memory_space<vmem>>, vector<16x128xf32>
    tpu.vector_store %arg6[%c0_6, %c0_7], %7 {strides = array<i32>} : memref<16x128xf32, #tpu.memory_space<vmem>>, vector<16x128xf32>,
    %c0_i32_8 = arith.constant 0 : i32
    %9 = arith.cmpi eq, %arg2, %c0_i32_8 : i32
    %10 = arith.extui %9 : i1 to i32
    %c0_i32_9 = arith.constant 0 : i32
    %11 = arith.cmpi ne, %10, %c0_i32_9 : i32
    scf.if %11 {
      %c0_10 = arith.constant 0 : index
      %c0_11 = arith.constant 0 : index
      %12 = vector.load %arg6[%c0_10, %c0_11] : memref<16x128xf32, #tpu.memory_space<vmem>>, vector<16x128xf32>
      %c0_12 = arith.constant 0 : index
      %c0_13 = arith.constant 0 : index
      %13 = vector.load %arg5[%c0_12, %c0_13] : memref<1x128xf32, #tpu.memory_space<vmem>>, vector<1x128xf32>
      %14 = vector.broadcast %13 : vector<1x128xf32> to vector<16x128xf32>
      %15 = arith.addf %12, %14 : vector<16x128xf32>
      %c0_14 = arith.constant 0 : index
      %c0_15 = arith.constant 0 : index
      %16 = vector.load %arg6[%c0_14, %c0_15] : memref<16x128xf32, #tpu.memory_space<vmem>>, vector<16x128xf32>
      tpu.vector_store %arg6[%c0_14, %c0_15], %15 {strides = array<i32>} : memref<16x128xf32, #tpu.memory_space<vmem>>, vector<16x128xf32>,
    } else {
    }
    return
  }
  func.func @transform_0(%arg0: i32, %arg1: i32, %arg2: i32) -> (i32, i32) {
    %c0_i32 = arith.constant 0 : i32
    return %arg0, %arg2 : i32, i32
  }
  func.func @transform_1(%arg0: i32, %arg1: i32, %arg2: i32) -> (i32, i32) {
    %c0_i32 = arith.constant 0 : i32
    return %arg2, %arg1 : i32, i32
  }
  func.func @transform_2(%arg0: i32, %arg1: i32, %arg2: i32) -> (i32, i32) {
    %c0_i32 = arith.constant 0 : i32
    %c0_i32_0 = arith.constant 0 : i32
    return %c0_i32, %arg1 : i32, i32
  }
  func.func @transform_3(%arg0: i32, %arg1: i32, %arg2: i32) -> (i32, i32) {
    %c0_i32 = arith.constant 0 : i32
    return %arg0, %arg1 : i32, i32
  }
}

</mosaic_0001>

<llo_original>
// kernel: _linear_pallas.1
$region0: #{_linear_pallas.1}
  #allocation0 [shape = 'u32[]', space=smem, size = 0x4, offset = 0x4, fixed_abs, tag = 'smem constant byte address 0x4 - core index']
  #allocation1 [shape = 'u32[72,128]{1,0:T(1,128)}', space=vmem, size = 0x9000, scoped, tag = 'internal scratch']
  %s0 = inlined_call_operand.hbm [shape: bf16[16,128], index: 0, kind: input, shape index: {}]
  %s1 = inlined_call_operand.hbm [shape: bf16[128,128], index: 1, kind: input, shape index: {}]
  %s2 = inlined_call_operand.vmem [shape: f32[1,128], index: 2, kind: input, shape index: {}]
  %s3 = inlined_call_operand.hbm [shape: f32[16,128], index: 3, kind: output, shape index: {}]
  %s4 = sld [smem:[#allocation0]]
  $region38: #{_linear_pallas.1} parent=0
    _
  %s6 = ssub.s32 1, %s4
  %s7 = scalar_select 0, %s6, %s4
  $region1: #{_linear_pallas.1} parent=0
    #allocation2 [shape = 'u8[4096]{0}', space=vmem, size = 0x1000, scoped, tag = 'input window, operand 0, single buffered']
    #allocation3 [shape = 's32[1]{0}', space=sflag, size = 0x4, scoped, tag = 'scoped memory for _linear_pallas.1']
    #allocation4 [shape = 's32[1]{0}', space=sflag, size = 0x4, scoped, tag = 'scoped memory for _linear_pallas.1']
    #allocation5 [shape = 'u8[32768]{0}', space=vmem, size = 0x8000, scoped, tag = 'input window, operand 1, single buffered']
    #allocation6 [shape = 's32[1]{0}', space=sflag, size = 0x4, scoped, tag = 'scoped memory for _linear_pallas.1']
    #allocation7 [shape = 'u8[8192]{0}', space=vmem, size = 0x2000, scoped, tag = 'output window, operand 0, single buffered']
    %8 = vsyncpa [#allocation3], 0
    %9 = vsyncpa [#allocation6], 0
    %10 = vsyncpa [#allocation4], 0
    // Predicated region
    $region2: #{_linear_pallas.1} parent=1 // pred_check
      _
    $region3: #{_linear_pallas.1} parent=1 // pred_check_branch
      %12 = sbr.rel (0) target = $region5
    $region4: #{_linear_pallas.1} parent=1 // pred_region
      %14 = vsyncadd [#allocation3], 0
      %s15 = sshll.u32 %s0, 4
      %s16 = int_to_ptr.hbm [resolvable:$true] %s15
      %s17 = sshll.u32 [#allocation2], 4
      %s18 = int_to_ptr.vmem [resolvable:$true] %s17
      %23 = dma.hbm_to_vmem [thread:$0]  %s16, 128, %s18, [#allocation3], 64, 64, 4
    $region5: #{_linear_pallas.1} parent=1 // pred_fallthru
      _
    // Predicated region
    $region6: #{_linear_pallas.1} parent=1 // pred_check
      _
    $region7: #{_linear_pallas.1} parent=1 // pred_check_branch
      %25 = sbr.rel (0) target = $region9
    $region8: #{_linear_pallas.1} parent=1 // pred_region
      %27 = vsyncadd [#allocation6], 0
      %s28 = sshll.u32 %s1, 4
      %s29 = int_to_ptr.hbm [resolvable:$true] %s28
      %s30 = sshll.u32 [#allocation5], 4
      %s31 = int_to_ptr.vmem [resolvable:$true] %s30
      %36 = dma.hbm_to_vmem [thread:$0]  %s29, 1024, %s31, [#allocation6], 64, 64, 4
    $region9: #{_linear_pallas.1} parent=1 // pred_fallthru
      _
    // Predicated region
    $region10: #{_linear_pallas.1} parent=1 // pred_check
      _
    $region11: #{_linear_pallas.1} parent=1 // pred_check_branch
      %38 = sbr.rel (0) target = $region13
    $region12: #{_linear_pallas.1} parent=1 // pred_region
      _
    $region13: #{_linear_pallas.1} parent=1 // pred_fallthru
      _
    // Predicated region
    $region14: #{_linear_pallas.1} parent=1 // pred_check
      _
    $region15: #{_linear_pallas.1} parent=1 // pred_check_branch
      %40 = sbr.rel (0) target = $region17
    $region16: #{_linear_pallas.1} parent=1 // pred_region
      %42 = dma.done [#allocation3], 128
    $region17: #{_linear_pallas.1} parent=1 // pred_fallthru
      _
    // Predicated region
    $region18: #{_linear_pallas.1} parent=1 // pred_check
      _
    $region19: #{_linear_pallas.1} parent=1 // pred_check_branch
      %44 = sbr.rel (0) target = $region21
    $region20: #{_linear_pallas.1} parent=1 // pred_region
      %46 = dma.done [#allocation6], 1024
    $region21: #{_linear_pallas.1} parent=1 // pred_fallthru
      _
    %p47 = scmp.eq.s32.totalorder 0, 0
    // Predicated region
    $region22: #{_linear_pallas.1} parent=1 // pred_check
      %p48 = pneg %p47
    $region23: #{_linear_pallas.1} parent=1 // pred_check_branch
      %50 = sbr.rel (%p48) target = $region25
    $region24: #{_linear_pallas.1} parent=1 // pred_region
      %51 = vst [vmem:[#allocation7] sm:$0xff] 0.0
      %52 = vst [vmem:[#allocation7 + $0x8] sm:$0xff] 0.0
    $region25: #{_linear_pallas.1} parent=1 // pred_fallthru
      _
    %v53 = vld [vmem:[#allocation7] sm:$0xff]
    %v54 = vld [vmem:[#allocation7 + $0x8] sm:$0xff]
    %v55 = vld [vmem:[#allocation2] sm:$0xf]
    %v56 = vld [vmem:[#allocation2 + $0x4] sm:$0xf]
    %v57 = vld [vmem:[#allocation5] sm:$0xf]
    %v58 = vld [vmem:[#allocation5 + $0x4] sm:$0xf]
    %v59 = vld [vmem:[#allocation5 + $0x8] sm:$0xf]
    %v60 = vld [vmem:[#allocation5 + $0xc] sm:$0xf]
    %v61 = vld [vmem:[#allocation5 + $0x10] sm:$0xf]
    %v62 = vld [vmem:[#allocation5 + $0x14] sm:$0xf]
    %v63 = vld [vmem:[#allocation5 + $0x18] sm:$0xf]
    %v64 = vld [vmem:[#allocation5 + $0x1c] sm:$0xf]
    %v65 = vld [vmem:[#allocation5 + $0x20] sm:$0xf]
    %v66 = vld [vmem:[#allocation5 + $0x24] sm:$0xf]
    %v67 = vld [vmem:[#allocation5 + $0x28] sm:$0xf]
    %v68 = vld [vmem:[#allocation5 + $0x2c] sm:$0xf]
    %v69 = vld [vmem:[#allocation5 + $0x30] sm:$0xf]
    %v70 = vld [vmem:[#allocation5 + $0x34] sm:$0xf]
    %v71 = vld [vmem:[#allocation5 + $0x38] sm:$0xf]
    %v72 = vld [vmem:[#allocation5 + $0x3c] sm:$0xf]
    %v75 = vunpack.c.l.b16 %v55
    %v76 = vunpack.c.l.b16 %v56
    %v77 = vpack.c.b16 %v76, %v75
    %v95 = vunpack.c.l.b16 %v57
    %v96 = vunpack.c.l.b16 %v58
    %v97 = vunpack.c.l.b16 %v59
    %v98 = vunpack.c.l.b16 %v60
    %v99 = vunpack.c.l.b16 %v61
    %v100 = vunpack.c.l.b16 %v62
    %v101 = vunpack.c.l.b16 %v63
    %v102 = vunpack.c.l.b16 %v64
    %v103 = vunpack.c.l.b16 %v65
    %v104 = vunpack.c.l.b16 %v66
    %v105 = vunpack.c.l.b16 %v67
    %v106 = vunpack.c.l.b16 %v68
    %v107 = vunpack.c.l.b16 %v69
    %v108 = vunpack.c.l.b16 %v70
    %v109 = vunpack.c.l.b16 %v71
    %v110 = vunpack.c.l.b16 %v72
    %v111 = vpack.c.b16 %v96, %v95
    %v112 = vpack.c.b16 %v98, %v97
    %v113 = vpack.c.b16 %v100, %v99
    %v114 = vpack.c.b16 %v102, %v101
    %v115 = vpack.c.b16 %v104, %v103
    %v116 = vpack.c.b16 %v106, %v105
    %v117 = vpack.c.b16 %v108, %v107
    %v118 = vpack.c.b16 %v110, %v109
    %127 = vmatpush.bf16.msra.mxu0 %v118
    %128 = vmatpush.bf16.msra.mxu0 %v117
    %129 = vmatpush.bf16.msra.mxu0 %v116
    %130 = vmatpush.bf16.msra.mxu0 %v115
    %131 = vmatpush.bf16.msra.mxu0 %v114
    %132 = vmatpush.bf16.msra.mxu0 %v113
    %133 = vmatpush.bf16.msra.mxu0 %v112
    %134 = vmatpush.bf16.msra.mxu0 %v111
    %135 = vmatmul.bf16.gmra.mxu0 %v77
    %v136 = vpop.f32.mrf.mxu0
    %v137 = vadd.f32 0.0, %v136
    %v138 = vpop.f32.mrf.mxu0
    %v139 = vadd.f32 0.0, %v138
    %140 = vdwg.mxu0
    %v141 = vadd.f32 %v53, %v137
    %v142 = vadd.f32 %v54, %v139
    %143 = vst [vmem:[#allocation7] sm:$0xff] %v141
    %144 = vst [vmem:[#allocation7 + $0x8] sm:$0xff] %v142
    // Predicated region
    $region26: #{_linear_pallas.1} parent=1 // pred_check
      %p145 = pneg %p47
    $region27: #{_linear_pallas.1} parent=1 // pred_check_branch
      %147 = sbr.rel (%p145) target = $region29
    $region28: #{_linear_pallas.1} parent=1 // pred_region
      %v148 = vld [vmem:[#allocation7] sm:$0xff]
      %v149 = vld [vmem:[#allocation7 + $0x8] sm:$0xff]
      %v150 = vld [vmem:[%s2] sm:$0x1]
      %v152 = vperm.slane %v150, 0
      %v154 = vadd.f32 %v148, %v152
      %v155 = vadd.f32 %v149, %v152
      %156 = vst [vmem:[#allocation7] sm:$0xff] %v154
      %157 = vst [vmem:[#allocation7 + $0x8] sm:$0xff] %v155
    $region29: #{_linear_pallas.1} parent=1 // pred_fallthru
      _
    // Predicated region
    $region30: #{_linear_pallas.1} parent=1 // pred_check
      _
    $region31: #{_linear_pallas.1} parent=1 // pred_check_branch
      %159 = sbr.rel (0) target = $region33
    $region32: #{_linear_pallas.1} parent=1 // pred_region
      %161 = vsyncadd [#allocation4], 0
      %s162 = sshll.u32 [#allocation7], 4
      %s163 = int_to_ptr.vmem [resolvable:$true] %s162
      %s164 = sshll.u32 %s3, 4
      %s165 = int_to_ptr.hbm [resolvable:$true] %s164
      %170 = dma.vmem_to_hbm [thread:$0]  %s163, 256, %s165, [#allocation4], 128, 128, 8
    $region33: #{_linear_pallas.1} parent=1 // pred_fallthru
      _
    // Predicated region
    $region34: #{_linear_pallas.1} parent=1 // pred_check
      _
    $region35: #{_linear_pallas.1} parent=1 // pred_check_branch
      %172 = sbr.rel (0) target = $region37
    $region36: #{_linear_pallas.1} parent=1 // pred_region
      %174 = dma.done [#allocation4], 256
    $region37: #{_linear_pallas.1} parent=1 // pred_fallthru
      _
    %175 = vsyncpa [#allocation3], 1
    %176 = vsyncpa [#allocation6], 1
    %177 = vsyncpa [#allocation4], 1

</llo_original>
